<compile_context>
chip_gen: v7x
topology: tpu7x:2x2x1
jax: 0.10.0
libtpu: 0.0.40
codegen_flags: <defaults>
</compile_context>

<pallas_src>
import functools

import jax
import jax.numpy as jnp
from jax.experimental import pallas as pl
from jax.experimental.pallas import tpu as pltpu

LANES = 128


def _round_up(x: int, m: int) -> int:
    return ((x + m - 1) // m) * m


def _chip_flags():
    """(has_two_tensorcores, has_small_scoped_vmem) from the device kind."""
    try:
        kind = jax.devices()[0].device_kind.lower()
    except Exception:
        kind = ""
    two_cores = "v7" in kind                  # v7x: 2 TensorCores / chip
    small_vmem = ("v5" in kind) or ("v4" in kind)  # 16 MiB scoped-VMEM default
    return two_cores, small_vmem


def _psnr_kernel(x_ref, y_ref, sum_out_ref, max_out_ref, sum_acc, max_acc, *,
                 rows, row_tile, steps_per_split, full_blocks, total_steps,
                 in_pack):
    c = pl.program_id(0)   # parallel split axis (size 1 on single-TC chips)
    i = pl.program_id(1)   # sequential reduction over row tiles

    @pl.when(i == 0)
    def _():
        sum_acc[...] = jnp.zeros_like(sum_acc)
        max_acc[...] = jnp.zeros_like(max_acc)

    def accumulate(mask):
        x = x_ref[...]
        y = y_ref[...]
        d = x.astype(jnp.float32) - y.astype(jnp.float32)
        d2 = d * d
        ax = jnp.abs(x)                      # native dtype: abs / max are exact
        if mask is not None:
            d2 = jnp.where(mask, d2, 0.0)
            ax = jnp.where(mask, ax, jnp.zeros_like(ax))
        # per-tile tree reduce (tile-aligned reshape, pure VALU) -> one small
        # add / max into the (8, 128) accumulators instead of a full-tile RMW
        d2 = d2.reshape(row_tile // 8, 8, LANES).sum(axis=0)
        axm = ax.reshape(row_tile // in_pack, in_pack, LANES).max(axis=0)
        axm = axm.astype(jnp.float32)
        if in_pack != 8:                     # sub-32-bit inputs: fold to (8,128)
            axm = axm.reshape(in_pack // 8, 8, LANES).max(axis=0)
        sum_acc[...] += d2
        max_acc[...] = jnp.maximum(max_acc[...], axm)

    if full_blocks == total_steps:
        # every tile is fully valid -> mask-free hot path
        accumulate(None)
    else:
        logical = c * steps_per_split + i

        @pl.when(logical < full_blocks)
        def _():
            accumulate(None)

        @pl.when(logical >= full_blocks)
        def _():
            # partially valid (or fully padded) tile: mask rows >= valid count
            valid = rows - logical * row_tile
            row_id = jax.lax.broadcasted_iota(jnp.int32, (row_tile, LANES), 0)
            accumulate(row_id < valid)

    @pl.when(i == steps_per_split - 1)
    def _():
        ps = jnp.sum(sum_acc[...])           # single cross-lane reduce / split
        pm = jnp.max(max_acc[...])
        sum_out_ref[...] = jnp.full(sum_out_ref.shape, ps, jnp.float32)
        max_out_ref[...] = jnp.full(max_out_ref.shape, pm, jnp.float32)


@jax.jit
def psnr_loss(x: jax.Array, y: jax.Array) -> jax.Array:
    assert x.shape == y.shape, (x.shape, y.shape)

    n_true = x.size
    itemsize = jnp.dtype(x.dtype).itemsize

    xf = jnp.ravel(x)
    yf = jnp.ravel(y)

    # Ragged <128-element tail (n % 128 != 0, rare) handled with plain jnp ops
    # and folded into the final scalars; avoids padding the whole array.
    n_main = (n_true // LANES) * LANES
    tail_sq = tail_max = None
    if n_main != n_true:
        xt = xf[n_main:].astype(jnp.float32)
        yt = yf[n_main:].astype(jnp.float32)
        tail_sq = jnp.sum(jnp.square(xt - yt))
        tail_max = jnp.max(jnp.abs(xt))
        xf = xf[:n_main]
        yf = yf[:n_main]

    if n_main == 0:
        # fewer than 128 elements total: nothing for the kernel to do
        mse = tail_sq / jnp.float32(n_true)
        return mse / jnp.square(tail_max)

    rows = n_main // LANES
    x2 = xf.reshape(rows, LANES)   # contiguous reshape under jit: no copy
    y2 = yf.reshape(rows, LANES)

    two_cores, small_vmem = _chip_flags()
    num_splits = 2 if two_cores else 1                 # engage both TCs on v7x
    tile_bytes = (2 if small_vmem else 4) * 1024 * 1024

    in_pack = 8 * max(1, 4 // itemsize)   # 8 rows f32, 16 bf16, 32 int8
    max_rows = max(in_pack,
                   (tile_bytes // (LANES * itemsize)) // in_pack * in_pack)
    row_tile = min(max_rows, _round_up(rows, in_pack))

    total_blocks = pl.cdiv(rows, row_tile)
    full_blocks = rows // row_tile
    steps_per_split = pl.cdiv(total_blocks, num_splits)
    total_steps = num_splits * steps_per_split

    if total_steps > total_blocks:
        # padded grid steps (odd tile count on the 2-TC split): clamp their
        # block index; their data is fully masked inside the kernel.
        in_map = lambda c, i: (jnp.minimum(c * steps_per_split + i,
                                           total_blocks - 1), 0)
    else:
        in_map = lambda c, i: (c * steps_per_split + i, 0)
    out_map = lambda c, i: (c, 0, 0)

    kernel = functools.partial(
        _psnr_kernel, rows=rows, row_tile=row_tile,
        steps_per_split=steps_per_split, full_blocks=full_blocks,
        total_steps=total_steps, in_pack=in_pack)

    partial_sum, partial_max = pl.pallas_call(
        kernel,
        out_shape=(
            jax.ShapeDtypeStruct((num_splits, 1, LANES), jnp.float32),
            jax.ShapeDtypeStruct((num_splits, 1, LANES), jnp.float32),
        ),
        grid_spec=pltpu.PrefetchScalarGridSpec(
            num_scalar_prefetch=0,
            grid=(num_splits, steps_per_split),
            in_specs=[
                pl.BlockSpec((row_tile, LANES), in_map),
                pl.BlockSpec((row_tile, LANES), in_map),
            ],
            out_specs=[
                pl.BlockSpec((1, 1, LANES), out_map),
                pl.BlockSpec((1, 1, LANES), out_map),
            ],
            scratch_shapes=[
                pltpu.VMEM((8, LANES), jnp.float32),   # running sum of (x-y)^2
                pltpu.VMEM((8, LANES), jnp.float32),   # running max of |x|
            ],
        ),
        compiler_params=pltpu.CompilerParams(
            dimension_semantics=("parallel", "arbitrary"),
            vmem_limit_bytes=32 * 1024 * 1024,
        ),
        cost_estimate=pl.CostEstimate(
            flops=5 * n_main,
            transcendentals=0,
            bytes_accessed=2 * rows * LANES * itemsize,
        ),
    )(x2, y2)

    total_sq = jnp.sum(partial_sum[:, 0, 0])
    max_abs = jnp.max(partial_max[:, 0, 0])
    if tail_sq is not None:
        total_sq = total_sq + tail_sq
        max_abs = jnp.maximum(max_abs, tail_max)

    mse = total_sq / jnp.float32(n_true)
    return mse / jnp.square(max_abs)


if __name__ == "__main__":
    key = jax.random.PRNGKey(0)
    kx, ky = jax.random.split(key)
    # NCHW, matching the PyTorch convention: batch=2, channels=4, spatial=16
    X = jax.random.normal(kx, (2, 4, 16, 16), dtype=jnp.float32)
    Y = jax.random.normal(ky, (2, 4, 16, 16), dtype=jnp.float32)

    loss = psnr_loss(X, Y)
    jax.block_until_ready(loss)

    # reference check in plain JAX
    ref = jnp.mean(jnp.square(X - Y)) / jnp.max(jnp.square(X))
    assert jnp.allclose(loss, ref, rtol=1e-5, atol=1e-6), (loss, ref)

    print("KERNEL_OK")
</pallas_src>

<mosaic_0001>
module attributes {stable_mosaic.version = 11 : i64} {
  func.func @_psnr_kernel(%arg0: i32, %arg1: i32, %arg2: memref<16x128xf32, #tpu.memory_space<vmem>>, %arg3: memref<16x128xf32, #tpu.memory_space<vmem>>, %arg4: memref<1x1x128xf32, #tpu.memory_space<vmem>>, %arg5: memref<1x1x128xf32, #tpu.memory_space<vmem>>, %arg6: memref<8x128xf32, #tpu.memory_space<vmem>>, %arg7: memref<8x128xf32, #tpu.memory_space<vmem>>) attributes {dimension_semantics = [#tpu.dimension_semantics<parallel>, #tpu.dimension_semantics<arbitrary>], iteration_bounds = array<i64: 1, 1>, scalar_prefetch = 0 : i64, scratch_operands = 2 : i64, tpu.core_type = #tpu.core_type<tc>, window_params = [{transform_indices = @transform_0, window_bounds = array<i64: 16, 128>}, {transform_indices = @transform_1, window_bounds = array<i64: 16, 128>}, {transform_indices = @transform_2, window_bounds = array<i64: 1, 1, 128>}, {transform_indices = @transform_3, window_bounds = array<i64: 1, 1, 128>}]} {
    %c0_i32 = arith.constant 0 : i32
    %0 = arith.cmpi eq, %arg1, %c0_i32 : i32
    %1 = arith.extui %0 : i1 to i32
    %c0_i32_0 = arith.constant 0 : i32
    %2 = arith.cmpi ne, %1, %c0_i32_0 : i32
    scf.if %2 {
      %cst_15 = arith.constant 0.000000e+00 : f32
      %21 = vector.broadcast %cst_15 : f32 to vector<8x128xf32>
      %c0_16 = arith.constant 0 : index
      %c0_17 = arith.constant 0 : index
      %22 = vector.load %arg6[%c0_16, %c0_17] : memref<8x128xf32, #tpu.memory_space<vmem>>, vector<8x128xf32>
      tpu.vector_store %arg6[%c0_16, %c0_17], %21 {strides = array<i32>} : memref<8x128xf32, #tpu.memory_space<vmem>>, vector<8x128xf32>,
      %cst_18 = arith.constant 0.000000e+00 : f32
      %23 = vector.broadcast %cst_18 : f32 to vector<8x128xf32>
      %c0_19 = arith.constant 0 : index
      %c0_20 = arith.constant 0 : index
      %24 = vector.load %arg7[%c0_19, %c0_20] : memref<8x128xf32, #tpu.memory_space<vmem>>, vector<8x128xf32>
      tpu.vector_store %arg7[%c0_19, %c0_20], %23 {strides = array<i32>} : memref<8x128xf32, #tpu.memory_space<vmem>>, vector<8x128xf32>,
    } else {
    }
    %c0 = arith.constant 0 : index
    %c0_1 = arith.constant 0 : index
    %3 = vector.load %arg2[%c0, %c0_1] : memref<16x128xf32, #tpu.memory_space<vmem>>, vector<16x128xf32>
    %c0_2 = arith.constant 0 : index
    %c0_3 = arith.constant 0 : index
    %4 = vector.load %arg3[%c0_2, %c0_3] : memref<16x128xf32, #tpu.memory_space<vmem>>, vector<16x128xf32>
    %5 = arith.subf %3, %4 : vector<16x128xf32>
    %6 = arith.mulf %5, %5 : vector<16x128xf32>
    %7 = math.absf %3 : vector<16x128xf32>
    %8 = vector.shape_cast %6 : vector<16x128xf32> to vector<2x8x128xf32>
    %cst = arith.constant dense<0.000000e+00> : vector<8x128xf32>
    %9 = vector.multi_reduction <add>, %8, %cst [0] : vector<2x8x128xf32> to vector<8x128xf32>
    %10 = vector.shape_cast %7 : vector<16x128xf32> to vector<2x8x128xf32>
    %cst_4 = arith.constant dense<0xFF800000> : vector<8x128xf32>
    %11 = vector.multi_reduction <maximumf>, %10, %cst_4 [0] : vector<2x8x128xf32> to vector<8x128xf32>
    %c0_5 = arith.constant 0 : index
    %c0_6 = arith.constant 0 : index
    %12 = vector.load %arg6[%c0_5, %c0_6] : memref<8x128xf32, #tpu.memory_space<vmem>>, vector<8x128xf32>
    %13 = arith.addf %12, %9 : vector<8x128xf32>
    %c0_7 = arith.constant 0 : index
    %c0_8 = arith.constant 0 : index
    %14 = vector.load %arg6[%c0_7, %c0_8] : memref<8x128xf32, #tpu.memory_space<vmem>>, vector<8x128xf32>
    tpu.vector_store %arg6[%c0_7, %c0_8], %13 {strides = array<i32>} : memref<8x128xf32, #tpu.memory_space<vmem>>, vector<8x128xf32>,
    %c0_9 = arith.constant 0 : index
    %c0_10 = arith.constant 0 : index
    %15 = vector.load %arg7[%c0_9, %c0_10] : memref<8x128xf32, #tpu.memory_space<vmem>>, vector<8x128xf32>
    %16 = arith.maximumf %15, %11 : vector<8x128xf32>
    %c0_11 = arith.constant 0 : index
    %c0_12 = arith.constant 0 : index
    %17 = vector.load %arg7[%c0_11, %c0_12] : memref<8x128xf32, #tpu.memory_space<vmem>>, vector<8x128xf32>
    tpu.vector_store %arg7[%c0_11, %c0_12], %16 {strides = array<i32>} : memref<8x128xf32, #tpu.memory_space<vmem>>, vector<8x128xf32>,
    %c0_i32_13 = arith.constant 0 : i32
    %18 = arith.cmpi eq, %arg1, %c0_i32_13 : i32
    %19 = arith.extui %18 : i1 to i32
    %c0_i32_14 = arith.constant 0 : i32
    %20 = arith.cmpi ne, %19, %c0_i32_14 : i32
    scf.if %20 {
      %c0_15 = arith.constant 0 : index
      %c0_16 = arith.constant 0 : index
      %21 = vector.load %arg6[%c0_15, %c0_16] : memref<8x128xf32, #tpu.memory_space<vmem>>, vector<8x128xf32>
      %22 = vector.shape_cast %21 : vector<8x128xf32> to vector<1x8x128xf32>
      %cst_17 = arith.constant dense<0.000000e+00> : vector<1xf32>
      %23 = vector.multi_reduction <add>, %22, %cst_17 [1, 2] : vector<1x8x128xf32> to vector<1xf32>
      %24 = vector.shape_cast %23 : vector<1xf32> to vector<1x1x1xf32>
      %25 = vector.extract %24[0, 0, 0] : f32 from vector<1x1x1xf32>
      %c0_18 = arith.constant 0 : index
      %c0_19 = arith.constant 0 : index
      %26 = vector.load %arg7[%c0_18, %c0_19] : memref<8x128xf32, #tpu.memory_space<vmem>>, vector<8x128xf32>
      %27 = vector.shape_cast %26 : vector<8x128xf32> to vector<1x8x128xf32>
      %cst_20 = arith.constant dense<0xFF800000> : vector<1xf32>
      %28 = vector.multi_reduction <maximumf>, %27, %cst_20 [1, 2] : vector<1x8x128xf32> to vector<1xf32>
      %29 = vector.shape_cast %28 : vector<1xf32> to vector<1x1x1xf32>
      %30 = vector.extract %29[0, 0, 0] : f32 from vector<1x1x1xf32>
      %31 = vector.broadcast %25 : f32 to vector<1x1x128xf32>
      %c0_21 = arith.constant 0 : index
      %c0_22 = arith.constant 0 : index
      %c0_23 = arith.constant 0 : index
      %32 = vector.load %arg4[%c0_21, %c0_22, %c0_23] : memref<1x1x128xf32, #tpu.memory_space<vmem>>, vector<1x1x128xf32>
      tpu.vector_store %arg4[%c0_21, %c0_22, %c0_23], %31 {strides = array<i32>} : memref<1x1x128xf32, #tpu.memory_space<vmem>>, vector<1x1x128xf32>,
      %33 = vector.broadcast %30 : f32 to vector<1x1x128xf32>
      %c0_24 = arith.constant 0 : index
      %c0_25 = arith.constant 0 : index
      %c0_26 = arith.constant 0 : index
      %34 = vector.load %arg5[%c0_24, %c0_25, %c0_26] : memref<1x1x128xf32, #tpu.memory_space<vmem>>, vector<1x1x128xf32>
      tpu.vector_store %arg5[%c0_24, %c0_25, %c0_26], %33 {strides = array<i32>} : memref<1x1x128xf32, #tpu.memory_space<vmem>>, vector<1x1x128xf32>,
    } else {
    }
    return
  }
  func.func @transform_0(%arg0: i32, %arg1: i32) -> (i32, i32) {
    %c1_i32 = arith.constant 1 : i32
    %0 = arith.muli %arg0, %c1_i32 : i32
    %1 = arith.addi %0, %arg1 : i32
    %c0_i32 = arith.constant 0 : i32
    %c0_i32_0 = arith.constant 0 : i32
    return %1, %c0_i32 : i32, i32
  }
  func.func @transform_1(%arg0: i32, %arg1: i32) -> (i32, i32) {
    %c1_i32 = arith.constant 1 : i32
    %0 = arith.muli %arg0, %c1_i32 : i32
    %1 = arith.addi %0, %arg1 : i32
    %c0_i32 = arith.constant 0 : i32
    %c0_i32_0 = arith.constant 0 : i32
    return %1, %c0_i32 : i32, i32
  }
  func.func @transform_2(%arg0: i32, %arg1: i32) -> (i32, i32, i32) {
    %c0_i32 = arith.constant 0 : i32
    %c0_i32_0 = arith.constant 0 : i32
    %c0_i32_1 = arith.constant 0 : i32
    return %arg0, %c0_i32, %c0_i32_0 : i32, i32, i32
  }
  func.func @transform_3(%arg0: i32, %arg1: i32) -> (i32, i32, i32) {
    %c0_i32 = arith.constant 0 : i32
    %c0_i32_0 = arith.constant 0 : i32
    %c0_i32_1 = arith.constant 0 : i32
    return %arg0, %c0_i32, %c0_i32_0 : i32, i32, i32
  }
}

</mosaic_0001>

<llo_original>
// kernel: psnr_loss.1
$region0: #{psnr_loss.1}
  #allocation0 [shape = 'u32[]', space=smem, size = 0x4, offset = 0x4, fixed_abs, tag = 'smem constant byte address 0x4 - core index']
  #allocation1 [shape = 'u32[144,128]{1,0:T(1,128)}', space=vmem, size = 0x12000, scoped, tag = 'internal scratch']
  #allocation2 [shape = 'f32[8,128]{1,0:T(8,128)}', space=vmem, size = 0x1000, scoped, tag = 'scratch operand']
  #allocation3 [shape = 'f32[8,128]{1,0:T(8,128)}', space=vmem, size = 0x1000, scoped, tag = 'scratch operand']
  %s0 = inlined_call_operand.vmem [shape: f32[16,128], index: 0, kind: input, shape index: {}]
  %s1 = inlined_call_operand.vmem [shape: f32[16,128], index: 1, kind: input, shape index: {}]
  %s2 = inlined_call_operand.vmem [shape: f32[1,1,128], index: 2, kind: output, shape index: {0}]
  %s3 = inlined_call_operand.vmem [shape: f32[1,1,128], index: 3, kind: output, shape index: {1}]
  %4 = xla_tuple %s2, %s3
  %s5 = sld [smem:[#allocation0]]
  $region34: #{psnr_loss.1} parent=0
    _
  %s7 = ssub.s32 1, %s5
  %s8 = scalar_select 0, %s7, %s5
  // Predicated region
  $region2: #{psnr_loss.1} parent=0 // pred_check
    _
  $region3: #{psnr_loss.1} parent=0 // pred_check_branch
    %10 = sbr.rel (0) target = $region5
  $region4: #{psnr_loss.1} parent=0 // pred_region
    %s11 = sadd.s32 0, 0
    %s12 = smul.u32 2, %s11
    %p13 = scmp.lt.s32.totalorder %s12, 1
    %s14 = scalar_select %p13, %s12, 1
    %s15 = smul.addr %s14, 8
    %s16 = scalar_lea.vmem %s0, %s15
    %s17 = sadd.s32 0, 0
    %s18 = smul.u32 2, %s17
  $region5: #{psnr_loss.1} parent=0 // pred_fallthru
    _
  // Predicated region
  $region6: #{psnr_loss.1} parent=0 // pred_check
    _
  $region7: #{psnr_loss.1} parent=0 // pred_check_branch
    %20 = sbr.rel (0) target = $region9
  $region8: #{psnr_loss.1} parent=0 // pred_region
    %s21 = sadd.s32 0, 0
    %s22 = smul.u32 2, %s21
    %p23 = scmp.lt.s32.totalorder %s22, 1
    %s24 = scalar_select %p23, %s22, 1
    %s25 = smul.addr %s24, 8
    %s26 = scalar_lea.vmem %s1, %s25
    %s27 = sadd.s32 0, 0
    %s28 = smul.u32 2, %s27
  $region9: #{psnr_loss.1} parent=0 // pred_fallthru
    _
  %s29 = sadd.s32 0, 0
  %s30 = smul.u32 2, %s29
  %p31 = scmp.lt.s32.totalorder %s30, 1
  %s32 = scalar_select %p31, %s30, 1
  %s33 = smul.addr %s32, 8
  %s34 = scalar_lea.vmem %s0, %s33
  %s35 = sadd.s32 0, 0
  %s36 = smul.u32 2, %s35
  %p37 = scmp.lt.s32.totalorder %s36, 1
  %s38 = scalar_select %p37, %s36, 1
  %s39 = smul.addr %s38, 8
  %s40 = scalar_lea.vmem %s1, %s39
  %s41 = sadd.s32 0, 0
  %s42 = smul.u32 2, %s41
  %p43 = scmp.lt.s32.totalorder %s42, 1
  %s44 = scalar_select %p43, %s42, 1
  %s45 = smul.addr %s44, 8
  %s46 = scalar_lea.vmem %s0, %s45
  %s47 = sadd.s32 0, 0
  %s48 = smul.u32 2, %s47
  %s49 = sadd.s32 0, 0
  %s50 = smul.u32 2, %s49
  %p51 = scmp.lt.s32.totalorder %s50, 1
  %s52 = scalar_select %p51, %s50, 1
  %s53 = smul.addr %s52, 8
  %s54 = scalar_lea.vmem %s1, %s53
  %s55 = sadd.s32 0, 0
  %s56 = smul.u32 2, %s55
  %p57 = scmp.eq.s32.totalorder 0, 0
  // Predicated region
  $region10: #{psnr_loss.1} parent=0 // pred_check
    %p58 = pneg %p57
  $region11: #{psnr_loss.1} parent=0 // pred_check_branch
    %60 = sbr.rel (%p58) target = $region13
  $region12: #{psnr_loss.1} parent=0 // pred_region
    %61 = vst [vmem:[#allocation2] sm:$0xff] 0.0
    %62 = vst [vmem:[#allocation3] sm:$0xff] 0.0
  $region13: #{psnr_loss.1} parent=0 // pred_fallthru
    _
  %v63 = vld [vmem:[%s46] sm:$0xff]
  %v64 = vld [vmem:[%s46 + $0x8] sm:$0xff]
  %v65 = vld [vmem:[%s54] sm:$0xff]
  %v66 = vld [vmem:[%s54 + $0x8] sm:$0xff]
  %v67 = vsub.f32 %v63, %v65
  %v68 = vsub.f32 %v64, %v66
  %v69 = vmul.f32 %v67, %v67
  %v70 = vmul.f32 %v68, %v68
  %v71 = vand.u32 2147483647, %v63
  %v72 = vand.u32 2147483647, %v64
  %v73 = vadd.f32 %v69, %v70
  %v74 = vmax.f32 %v71, %v72
  %v75 = vld [vmem:[#allocation2] sm:$0xff]
  %v76 = vadd.f32 %v75, %v73
  %77 = vst [vmem:[#allocation2] sm:$0xff] %v76
  %v78 = vld [vmem:[#allocation3] sm:$0xff]
  %v79 = vmax.f32 %v78, %v74
  %80 = vst [vmem:[#allocation3] sm:$0xff] %v79
  // Predicated region
  $region14: #{psnr_loss.1} parent=0 // pred_check
    %p81 = pneg %p57
  $region15: #{psnr_loss.1} parent=0 // pred_check_branch
    %83 = sbr.rel (%p81) target = $region17
  $region16: #{psnr_loss.1} parent=0 // pred_region
    %v84 = vld [vmem:[#allocation2] sm:$0xff]
    %85 = vadd.xlane.f32.xlu0 %v84
    %v86 = vpop.xlane.xlu0 %85
    %v87 = vrot.slane %v86, 4
    %v88 = vadd.f32 %v86, %v87
    %v89 = vrot.slane %v88, 2
    %v90 = vadd.f32 %v88, %v89
    %v91 = vrot.slane %v90, 1
    %v92 = vadd.f32 %v90, %v91
    %s93 = vtos %v92
    %v94 = vld [vmem:[#allocation3] sm:$0xff]
    %95 = vmax.xlane.f32.xlu0 %v94
    %v96 = vpop.xlane.xlu0 %95
    %v97 = vrot.slane %v96, 4
    %v98 = vmax.f32 %v96, %v97
    %v99 = vrot.slane %v98, 2
    %v100 = vmax.f32 %v98, %v99
    %v101 = vrot.slane %v100, 1
    %v102 = vmax.f32 %v100, %v101
    %s103 = vtos %v102
    %v104 = vstv %s93
    %105 = vst [vmem:[%s2] sm:$0x1] %v104
    %v106 = vstv %s103
    %107 = vst [vmem:[%s3] sm:$0x1] %v106
  $region17: #{psnr_loss.1} parent=0 // pred_fallthru
    _
  // Predicated region
  $region18: #{psnr_loss.1} parent=0 // pred_check
    _
  $region19: #{psnr_loss.1} parent=0 // pred_check_branch
    %109 = sbr.rel (0) target = $region21
  $region20: #{psnr_loss.1} parent=0 // pred_region
    _
  $region21: #{psnr_loss.1} parent=0 // pred_fallthru
    _
  // Predicated region
  $region22: #{psnr_loss.1} parent=0 // pred_check
    _
  $region23: #{psnr_loss.1} parent=0 // pred_check_branch
    %111 = sbr.rel (0) target = $region25
  $region24: #{psnr_loss.1} parent=0 // pred_region
    _
  $region25: #{psnr_loss.1} parent=0 // pred_fallthru
    _
  // Predicated region
  $region26: #{psnr_loss.1} parent=0 // pred_check
    _
  $region27: #{psnr_loss.1} parent=0 // pred_check_branch
    %113 = sbr.rel (0) target = $region29
  $region28: #{psnr_loss.1} parent=0 // pred_region
    _
  $region29: #{psnr_loss.1} parent=0 // pred_fallthru
    _
  // Predicated region
  $region30: #{psnr_loss.1} parent=0 // pred_check
    _
  $region31: #{psnr_loss.1} parent=0 // pred_check_branch
    %115 = sbr.rel (0) target = $region33
  $region32: #{psnr_loss.1} parent=0 // pred_region
    _
  $region33: #{psnr_loss.1} parent=0 // pred_fallthru
    _

</llo_original>
